<compile_context>
chip_gen: v5e
topology: v5e:2x2
jax: 0.10.0
libtpu: 0.0.40
codegen_flags: <defaults>
</compile_context>

<pallas_src>
import jax
import jax.numpy as jnp
from jax.experimental import pallas as pl
from jax.experimental.pallas import tpu as pltpu


def _round_up(x, m):
    return ((x + m - 1) // m) * m


def _link_predictor_kernel(xi_ref, xj_ref, w0t_ref, b0_ref, wft_ref, bf_ref,
                           o_ref, h_ref):
    # lin0 hoisted out of the inner (output-column) loop: compute it once per
    # row tile (j == 0) into VMEM scratch and reuse it for every column tile.
    @pl.when(pl.program_id(1) == 0)
    def _():
        x = xi_ref[...] * xj_ref[...]                               # (TM, Cin), VPU
        h = jnp.dot(x, w0t_ref[...],
                    preferred_element_type=jnp.float32)             # (TM, H), MXU
        h_ref[...] = jnp.maximum(h + b0_ref[...], 0.0)
        # TODO(synk): dropout is identity (inference semantics).

    # lin_final column tile: (TM, H) @ (H, TN) -> (TM, TN), plain MXU matmul.
    y = jnp.dot(h_ref[...], wft_ref[...], preferred_element_type=jnp.float32)
    y = y + bf_ref[...]                                             # (1, TN) bcast
    # sigmoid(y) = 0.5 * (tanh(y/2) + 1): single EUP op, numerically stable.
    o_ref[...] = (0.5 * (jnp.tanh(0.5 * y) + 1.0)).astype(o_ref.dtype)


def link_predictor_forward(x_i, x_j, w0, b0, wf, bf, *,
                           tm=256, tn=512, out_dtype=jnp.float32):
    """LinkPredictor.forward.

    x_i, x_j : (N, Cin)            node-pair features
    w0, b0   : (H, Cin), (H,)      lins[0] in PyTorch layout
    wf, bf   : (Nout, H), (Nout,)  lin_final (Nout == N per the module)
    returns  : (N, Nout) sigmoid scores in out_dtype (default f32)
    """
    N, Cin = x_i.shape
    H = w0.shape[0]
    Nout = wf.shape[0]

    # Row tiles: multiple of 8 (sublane).  Column tiles: multiple of 128
    # (lane-dense unmasked stores).  Pad so the tiles divide exactly.
    tm = min(tm, _round_up(N, 8))
    tn = min(tn, _round_up(Nout, 128))
    n_pad = _round_up(N, tm)
    m_pad = _round_up(Nout, tn)

    xi_p = jnp.pad(x_i, ((0, n_pad - N), (0, 0))) if n_pad != N else x_i
    xj_p = jnp.pad(x_j, ((0, n_pad - N), (0, 0))) if n_pad != N else x_j

    # One-time wrapper-side transposes (tiny vs. the (N, N) output): both
    # in-kernel matmuls become plain (M,K)@(K,N) with lane-dense weight tiles.
    w0_t = w0.T                                   # (Cin, H)
    wf_t = wf.T                                   # (H, Nout)
    if m_pad != Nout:
        wf_t = jnp.pad(wf_t, ((0, 0), (0, m_pad - Nout)))
        bf_p = jnp.pad(bf, ((0, m_pad - Nout),))
    else:
        bf_p = bf
    bf_2d = bf_p.reshape(1, m_pad)
    b0_2d = b0.reshape(1, H)

    grid = (n_pad // tm, m_pad // tn)

    flops = 2 * n_pad * Cin * H + 2 * n_pad * H * m_pad
    bytes_accessed = (4 * (2 * n_pad * Cin + Cin * H + H + H * m_pad + m_pad)
                      + jnp.dtype(out_dtype).itemsize * n_pad * m_pad)

    out = pl.pallas_call(
        _link_predictor_kernel,
        out_shape=jax.ShapeDtypeStruct((n_pad, m_pad), out_dtype),
        grid_spec=pltpu.PrefetchScalarGridSpec(
            num_scalar_prefetch=0,
            grid=grid,
            in_specs=[
                pl.BlockSpec((tm, Cin), lambda i, j: (i, 0)),   # x_i row tile
                pl.BlockSpec((tm, Cin), lambda i, j: (i, 0)),   # x_j row tile
                pl.BlockSpec((Cin, H), lambda i, j: (0, 0)),    # w0^T (resident)
                pl.BlockSpec((1, H), lambda i, j: (0, 0)),      # b0   (resident)
                pl.BlockSpec((H, tn), lambda i, j: (0, j)),     # wf^T column tile
                pl.BlockSpec((1, tn), lambda i, j: (0, j)),     # bf   column tile
            ],
            out_specs=pl.BlockSpec((tm, tn), lambda i, j: (i, j)),
            scratch_shapes=[pltpu.VMEM((tm, H), jnp.float32)],  # hoisted lin0
        ),
        compiler_params=pltpu.CompilerParams(
            # Row tiles are independent (sharded across the 2 TCs on v7x); the
            # column axis must stay "arbitrary" since the lin0 scratch is
            # reused across it for a fixed row tile.
            dimension_semantics=("parallel", "arbitrary"),
            vmem_limit_bytes=48 * 1024 * 1024,
        ),
        cost_estimate=pl.CostEstimate(
            flops=flops,
            transcendentals=n_pad * m_pad,
            bytes_accessed=bytes_accessed,
        ),
    )(xi_p, xj_p, w0_t, b0_2d, wf_t, bf_2d)

    if n_pad != N or m_pad != Nout:
        out = out[:N, :Nout]
    return out


def init_params(key, in_channels, hidden_channels, n_rows):
    """Deterministic PyTorch-style (uniform +/- 1/sqrt(fan_in)) initialization."""
    k0w, k0b, kfw, kfb = jax.random.split(key, 4)
    bound0 = 1.0 / jnp.sqrt(in_channels)
    boundf = 1.0 / jnp.sqrt(hidden_channels)
    w0 = jax.random.uniform(k0w, (hidden_channels, in_channels),
                            jnp.float32, -bound0, bound0)
    b0 = jax.random.uniform(k0b, (hidden_channels,), jnp.float32, -bound0, bound0)
    wf = jax.random.uniform(kfw, (n_rows, hidden_channels),
                            jnp.float32, -boundf, boundf)
    bf = jax.random.uniform(kfb, (n_rows,), jnp.float32, -boundf, boundf)
    return w0, b0, wf, bf


if __name__ == "__main__":
    # Shapes consistent with the module's forward: N rows, lin_final out == N.
    N = 256            # lane-dense output columns (multiple of 128)
    IN_CHANNELS = 16
    HIDDEN = 32

    key = jax.random.PRNGKey(0)
    k_xi, k_xj, k_params = jax.random.split(key, 3)

    x_i = jax.random.normal(k_xi, (N, IN_CHANNELS), jnp.float32)
    x_j = jax.random.normal(k_xj, (N, IN_CHANNELS), jnp.float32)
    w0, b0, wf, bf = init_params(k_params, IN_CHANNELS, HIDDEN, N)

    # 2x2 output-tile grid at these shapes (tm/tn clamped to 128/256).
    out = link_predictor_forward(x_i, x_j, w0, b0, wf, bf, tm=128, tn=128)
    jax.block_until_ready(out)

    ref = jax.nn.sigmoid(
        jnp.maximum((x_i * x_j) @ w0.T + b0, 0.0) @ wf.T + bf
    )
    assert out.shape == (N, N)
    assert jnp.allclose(out, ref, atol=1e-5, rtol=1e-5)

    # Ragged-N path (exercises row/column padding + output slice).
    N2 = 40
    x_i2 = jax.random.normal(jax.random.PRNGKey(1), (N2, IN_CHANNELS), jnp.float32)
    x_j2 = jax.random.normal(jax.random.PRNGKey(2), (N2, IN_CHANNELS), jnp.float32)
    w02, b02, wf2, bf2 = init_params(jax.random.PRNGKey(3), IN_CHANNELS, HIDDEN, N2)
    out2 = link_predictor_forward(x_i2, x_j2, w02, b02, wf2, bf2)
    jax.block_until_ready(out2)
    ref2 = jax.nn.sigmoid(
        jnp.maximum((x_i2 * x_j2) @ w02.T + b02, 0.0) @ wf2.T + bf2
    )
    assert out2.shape == (N2, N2)
    assert jnp.allclose(out2, ref2, atol=1e-5, rtol=1e-5)

    print("KERNEL_OK")
</pallas_src>

<mosaic_0001>
module attributes {stable_mosaic.version = 11 : i64} {
  func.func @_link_predictor_kernel(%arg0: i32, %arg1: i32, %arg2: memref<128x16xf32, #tpu.memory_space<vmem>>, %arg3: memref<128x16xf32, #tpu.memory_space<vmem>>, %arg4: memref<16x32xf32, #tpu.memory_space<vmem>>, %arg5: memref<1x32xf32, #tpu.memory_space<vmem>>, %arg6: memref<32x128xf32, #tpu.memory_space<vmem>>, %arg7: memref<1x128xf32, #tpu.memory_space<vmem>>, %arg8: memref<128x128xf32, #tpu.memory_space<vmem>>, %arg9: memref<128x32xf32, #tpu.memory_space<vmem>>) attributes {dimension_semantics = [#tpu.dimension_semantics<parallel>, #tpu.dimension_semantics<arbitrary>], iteration_bounds = array<i64: 2, 2>, scalar_prefetch = 0 : i64, scratch_operands = 1 : i64, tpu.core_type = #tpu.core_type<tc>, window_params = [{transform_indices = @transform_0, window_bounds = array<i64: 128, 16>}, {transform_indices = @transform_1, window_bounds = array<i64: 128, 16>}, {pipeline_mode = #tpu.pipeline_mode<synchronous>, transform_indices = @transform_2, window_bounds = array<i64: 16, 32>}, {pipeline_mode = #tpu.pipeline_mode<synchronous>, transform_indices = @transform_3, window_bounds = array<i64: 1, 32>}, {transform_indices = @transform_4, window_bounds = array<i64: 32, 128>}, {transform_indices = @transform_5, window_bounds = array<i64: 1, 128>}, {transform_indices = @transform_6, window_bounds = array<i64: 128, 128>}]} {
    %c0_i32 = arith.constant 0 : i32
    %0 = arith.cmpi eq, %arg1, %c0_i32 : i32
    %1 = arith.extui %0 : i1 to i32
    %c0_i32_0 = arith.constant 0 : i32
    %2 = arith.cmpi ne, %1, %c0_i32_0 : i32
    scf.if %2 {
      %c0_11 = arith.constant 0 : index
      %c0_12 = arith.constant 0 : index
      %17 = vector.load %arg2[%c0_11, %c0_12] : memref<128x16xf32, #tpu.memory_space<vmem>>, vector<128x16xf32>
      %c0_13 = arith.constant 0 : index
      %c0_14 = arith.constant 0 : index
      %18 = vector.load %arg3[%c0_13, %c0_14] : memref<128x16xf32, #tpu.memory_space<vmem>>, vector<128x16xf32>
      %19 = arith.mulf %17, %18 : vector<128x16xf32>
      %c0_15 = arith.constant 0 : index
      %c0_16 = arith.constant 0 : index
      %20 = vector.load %arg4[%c0_15, %c0_16] : memref<16x32xf32, #tpu.memory_space<vmem>>, vector<16x32xf32>
      %cst_17 = arith.constant dense<0.000000e+00> : vector<128x32xf32>
      %21 = tpu.matmul %19, %20, %cst_17 {dimension_numbers = #tpu.dot_dimension_numbers<[1], [0], [0], [1], [0, 0, 1, 1], [], []>} : vector<128x16xf32>, vector<16x32xf32>, vector<128x32xf32> -> vector<128x32xf32>
      %c0_18 = arith.constant 0 : index
      %c0_19 = arith.constant 0 : index
      %22 = vector.load %arg5[%c0_18, %c0_19] : memref<1x32xf32, #tpu.memory_space<vmem>>, vector<1x32xf32>
      %23 = vector.broadcast %22 : vector<1x32xf32> to vector<128x32xf32>
      %24 = arith.addf %21, %23 : vector<128x32xf32>
      %cst_20 = arith.constant 0.000000e+00 : f32
      %25 = vector.broadcast %cst_20 : f32 to vector<128x32xf32>
      %26 = arith.maximumf %24, %25 : vector<128x32xf32>
      %c0_21 = arith.constant 0 : index
      %c0_22 = arith.constant 0 : index
      %27 = vector.load %arg9[%c0_21, %c0_22] : memref<128x32xf32, #tpu.memory_space<vmem>>, vector<128x32xf32>
      tpu.vector_store %arg9[%c0_21, %c0_22], %26 {strides = array<i32>} : memref<128x32xf32, #tpu.memory_space<vmem>>, vector<128x32xf32>,
    } else {
    }
    %c0 = arith.constant 0 : index
    %c0_1 = arith.constant 0 : index
    %3 = vector.load %arg9[%c0, %c0_1] : memref<128x32xf32, #tpu.memory_space<vmem>>, vector<128x32xf32>
    %c0_2 = arith.constant 0 : index
    %c0_3 = arith.constant 0 : index
    %4 = vector.load %arg6[%c0_2, %c0_3] : memref<32x128xf32, #tpu.memory_space<vmem>>, vector<32x128xf32>
    %cst = arith.constant dense<0.000000e+00> : vector<128x128xf32>
    %5 = tpu.matmul %3, %4, %cst {dimension_numbers = #tpu.dot_dimension_numbers<[1], [0], [0], [1], [0, 0, 1, 1], [], []>} : vector<128x32xf32>, vector<32x128xf32>, vector<128x128xf32> -> vector<128x128xf32>
    %c0_4 = arith.constant 0 : index
    %c0_5 = arith.constant 0 : index
    %6 = vector.load %arg7[%c0_4, %c0_5] : memref<1x128xf32, #tpu.memory_space<vmem>>, vector<1x128xf32>
    %7 = vector.broadcast %6 : vector<1x128xf32> to vector<128x128xf32>
    %8 = arith.addf %5, %7 : vector<128x128xf32>
    %cst_6 = arith.constant 5.000000e-01 : f32
    %9 = vector.broadcast %cst_6 : f32 to vector<128x128xf32>
    %10 = arith.mulf %9, %8 : vector<128x128xf32>
    %11 = math.tanh %10 : vector<128x128xf32>
    %cst_7 = arith.constant 1.000000e+00 : f32
    %12 = vector.broadcast %cst_7 : f32 to vector<128x128xf32>
    %13 = arith.addf %11, %12 : vector<128x128xf32>
    %cst_8 = arith.constant 5.000000e-01 : f32
    %14 = vector.broadcast %cst_8 : f32 to vector<128x128xf32>
    %15 = arith.mulf %14, %13 : vector<128x128xf32>
    %c0_9 = arith.constant 0 : index
    %c0_10 = arith.constant 0 : index
    %16 = vector.load %arg8[%c0_9, %c0_10] : memref<128x128xf32, #tpu.memory_space<vmem>>, vector<128x128xf32>
    tpu.vector_store %arg8[%c0_9, %c0_10], %15 {strides = array<i32>} : memref<128x128xf32, #tpu.memory_space<vmem>>, vector<128x128xf32>,
    return
  }
  func.func @transform_0(%arg0: i32, %arg1: i32) -> (i32, i32) {
    %c0_i32 = arith.constant 0 : i32
    %c0_i32_0 = arith.constant 0 : i32
    return %arg0, %c0_i32 : i32, i32
  }
  func.func @transform_1(%arg0: i32, %arg1: i32) -> (i32, i32) {
    %c0_i32 = arith.constant 0 : i32
    %c0_i32_0 = arith.constant 0 : i32
    return %arg0, %c0_i32 : i32, i32
  }
  func.func @transform_2(%arg0: i32, %arg1: i32) -> (i32, i32) {
    %c0_i32 = arith.constant 0 : i32
    %c0_i32_0 = arith.constant 0 : i32
    %c0_i32_1 = arith.constant 0 : i32
    return %c0_i32, %c0_i32_0 : i32, i32
  }
  func.func @transform_3(%arg0: i32, %arg1: i32) -> (i32, i32) {
    %c0_i32 = arith.constant 0 : i32
    %c0_i32_0 = arith.constant 0 : i32
    %c0_i32_1 = arith.constant 0 : i32
    return %c0_i32, %c0_i32_0 : i32, i32
  }
  func.func @transform_4(%arg0: i32, %arg1: i32) -> (i32, i32) {
    %c0_i32 = arith.constant 0 : i32
    %c0_i32_0 = arith.constant 0 : i32
    return %c0_i32, %arg1 : i32, i32
  }
  func.func @transform_5(%arg0: i32, %arg1: i32) -> (i32, i32) {
    %c0_i32 = arith.constant 0 : i32
    %c0_i32_0 = arith.constant 0 : i32
    return %c0_i32, %arg1 : i32, i32
  }
  func.func @transform_6(%arg0: i32, %arg1: i32) -> (i32, i32) {
    %c0_i32 = arith.constant 0 : i32
    return %arg0, %arg1 : i32, i32
  }
}

</mosaic_0001>

<llo_original>
// kernel: tpu_custom_call.1
$region0: #{tpu_custom_call.1}
  #allocation0 [shape = 'u32[]', space=smem, size = 0x4, offset = 0x4, fixed_abs, tag = 'smem constant byte address 0x4 - core index']
  #allocation1 [shape = 'u32[72,128]{1,0:T(1,128)}', space=vmem, size = 0x9000, scoped, tag = 'internal scratch']
  #allocation2 [shape = 'f32[128,32]{1,0:T(8,128)}', space=vmem, size = 0x10000, scoped, tag = 'scratch operand']
  %s0 = inlined_call_operand.vmem [shape: f32[256,16], index: 0, kind: input, shape index: {}]
  %s1 = inlined_call_operand.vmem [shape: f32[256,16], index: 1, kind: input, shape index: {}]
  %s2 = inlined_call_operand.vmem [shape: f32[16,32], index: 2, kind: input, shape index: {}]
  %s3 = inlined_call_operand.vmem [shape: f32[1,32], index: 3, kind: input, shape index: {}]
  %s4 = inlined_call_operand.vmem [shape: f32[32,256], index: 4, kind: input, shape index: {}]
  %s5 = inlined_call_operand.vmem [shape: f32[1,256], index: 5, kind: input, shape index: {}]
  %s6 = inlined_call_operand.hbm [shape: f32[256,256], index: 6, kind: output, shape index: {}]
  %s7 = sld [smem:[#allocation0]]
  $region99: #{tpu_custom_call.1} parent=0
    _
  %s9 = ssub.s32 1, %s7
  %s10 = scalar_select 0, %s9, %s7
  $region1: #{tpu_custom_call.1} parent=0
    #allocation3 [shape = 'u8[32768]{0}', space=vmem, size = 0x8000, scoped, tag = 'input window, operand 4']
    #allocation4 [shape = 'u8[131072]{0}', space=vmem, size = 0x20000, scoped, tag = 'output window, operand 0']
    #allocation5 [shape = 's32[2]{0}', space=sflag, size = 0x8, scoped, tag = 'scoped memory for tpu_custom_call.1']
    %11 = vsyncpa [#allocation5], 0
    %s12 = scalar_lea.sflag [#allocation5], 1
    %13 = vsyncpa %s12, 0
    loop: start=0, step=1, limit=6
    $region2: #{tpu_custom_call.1} parent=1 // loop_pre_header
      _
    $region3: #{tpu_custom_call.1} parent=1 // loop_header
      %s15 = sphi 0, %s19
      %p16 = scmp.ge.s32.totalorder %s15, 6
      %s22 = sphi 0, %s34
      %s23 = sphi 0, %s30
      %s24 = sphi 0, %s22
      %s25 = sphi 0, %s23
      %s26 = sphi 0, %s24
      %s27 = sphi 0, %s25
      %s37 = sphi 0, %s39
      %s40 = sphi 0, %s37
      %s41 = sphi 0, %s40
      %s57 = sphi 0, %s41
      %s63 = sphi 0, %s65
      %s66 = sphi 0, %s63
      %s67 = sphi 0, %s66
      %s83 = sphi 0, %s67
      %s87 = sphi 0, %s87
      %s89 = sphi 0, %s87
      %s90 = sphi 0, %s89
      %s104 = sphi 0, %s90
      %s108 = sphi 0, %s108
      %s110 = sphi 0, %s108
      %s111 = sphi 0, %s110
      %s125 = sphi 0, %s111
      %s131 = sphi 0, %s133
      %s134 = sphi 0, %s131
      %s135 = sphi 0, %s134
      %s151 = sphi 0, %s135
      %s157 = sphi 0, %s159
      %s160 = sphi 0, %s157
      %s161 = sphi 0, %s160
      %s177 = sphi 0, %s161
      %s185 = sphi 0, %s187
      %s188 = sphi 0, %s185
      %s189 = sphi 0, %s188
      %s205 = sphi 0, %s189
    $region4: #{tpu_custom_call.1} parent=1 // loop_header_branch
      %18 = sbr.rel (%p16) target = $region8
    $region5: #{tpu_custom_call.1} parent=1 // loop_body
      %s20 = ssub.s32 %s15, 1
      %s21 = ssub.s32 %s15, 2
      %s28 = sadd.s32 1, %s23
      %p29 = scmp.ge.s32.totalorder %s28, 2
      %s30 = scalar_select %p29, 0, %s28
      %s31 = sadd.s32 1, %s22
      %s32 = scalar_select %p29, %s31, %s22
      %p33 = scmp.ge.s32.totalorder %s32, 2
      %s34 = scalar_select %p33, 0, %s32
      %s35 = ssub.s32 %s22, %s34
      %p36 = scmp.eq.s32.totalorder %s35, 0
      %s38 = sadd.s32 %s37, 1
      %s39 = scalar_select %p36, %s37, %s38
      %p42 = pneg %p36
      %p43 = scmp.eq.s32.totalorder %s15, 3
      %p44 = por %p42, %p43
      %p45 = scmp.ne.s32.totalorder %s37, %s40
      %p46 = scmp.eq.s32.totalorder %s15, 0
      %p47 = por %p45, %p46
      %p48 = scmp.ne.s32.totalorder %s37, %s40
      %p49 = scmp.eq.s32.totalorder %s20, 3
      %p50 = por %p48, %p49
      %p51 = scmp.ne.s32.totalorder %s40, %s41
      %p52 = scmp.eq.s32.totalorder %s20, 0
      %p53 = por %p51, %p52
      %p54 = scmp.ne.s32.totalorder %s40, %s41
      %p55 = scmp.eq.s32.totalorder %s21, 3
      %p56 = por %p54, %p55
      %p58 = scmp.ne.s32.totalorder %s41, %s57
      %p59 = scmp.eq.s32.totalorder %s21, 0
      %p60 = por %p58, %p59
      %s61 = ssub.s32 %s22, %s34
      %p62 = scmp.eq.s32.totalorder %s61, 0
      %s64 = sadd.s32 %s63, 1
      %s65 = scalar_select %p62, %s63, %s64
      %p68 = pneg %p62
      %p69 = scmp.eq.s32.totalorder %s15, 3
      %p70 = por %p68, %p69
      %p71 = scmp.ne.s32.totalorder %s63, %s66
      %p72 = scmp.eq.s32.totalorder %s15, 0
      %p73 = por %p71, %p72
      %p74 = scmp.ne.s32.totalorder %s63, %s66
      %p75 = scmp.eq.s32.totalorder %s20, 3
      %p76 = por %p74, %p75
      %p77 = scmp.ne.s32.totalorder %s66, %s67
      %p78 = scmp.eq.s32.totalorder %s20, 0
      %p79 = por %p77, %p78
      %p80 = scmp.ne.s32.totalorder %s66, %s67
      %p81 = scmp.eq.s32.totalorder %s21, 3
      %p82 = por %p80, %p81
      %p84 = scmp.ne.s32.totalorder %s67, %s83
      %p85 = scmp.eq.s32.totalorder %s21, 0
      %p86 = por %p84, %p85
      %s88 = sadd.s32 %s87, 1
      %p91 = scmp.eq.s32.totalorder %s15, 3
      %p92 = scmp.ne.s32.totalorder %s87, %s89
      %p93 = scmp.eq.s32.totalorder %s15, 0
      %p94 = por %p92, %p93
      %p95 = scmp.ne.s32.totalorder %s87, %s89
      %p96 = scmp.eq.s32.totalorder %s20, 3
      %p97 = por %p95, %p96
      %p98 = scmp.ne.s32.totalorder %s89, %s90
      %p99 = scmp.eq.s32.totalorder %s20, 0
      %p100 = por %p98, %p99
      %p101 = scmp.ne.s32.totalorder %s89, %s90
      %p102 = scmp.eq.s32.totalorder %s21, 3
      %p103 = por %p101, %p102
      %p105 = scmp.ne.s32.totalorder %s90, %s104
      %p106 = scmp.eq.s32.totalorder %s21, 0
      %p107 = por %p105, %p106
      %s109 = sadd.s32 %s108, 1
      %p112 = scmp.eq.s32.totalorder %s15, 3
      %p113 = scmp.ne.s32.totalorder %s108, %s110
      %p114 = scmp.eq.s32.totalorder %s15, 0
      %p115 = por %p113, %p114
      %p116 = scmp.ne.s32.totalorder %s108, %s110
      %p117 = scmp.eq.s32.totalorder %s20, 3
      %p118 = por %p116, %p117
      %p119 = scmp.ne.s32.totalorder %s110, %s111
      %p120 = scmp.eq.s32.totalorder %s20, 0
      %p121 = por %p119, %p120
      %p122 = scmp.ne.s32.totalorder %s110, %s111
      %p123 = scmp.eq.s32.totalorder %s21, 3
      %p124 = por %p122, %p123
      %p126 = scmp.ne.s32.totalorder %s111, %s125
      %p127 = scmp.eq.s32.totalorder %s21, 0
      %p128 = por %p126, %p127
      %s129 = ssub.s32 %s23, %s30
      %p130 = scmp.eq.s32.totalorder %s129, 0
      %s132 = sadd.s32 %s131, 1
      %s133 = scalar_select %p130, %s131, %s132
      %p136 = pneg %p130
      %p137 = scmp.eq.s32.totalorder %s15, 3
      %p138 = por %p136, %p137
      %p139 = scmp.ne.s32.totalorder %s131, %s134
      %p140 = scmp.eq.s32.totalorder %s15, 0
      %p141 = por %p139, %p140
      %p142 = scmp.ne.s32.totalorder %s131, %s134
      %p143 = scmp.eq.s32.totalorder %s20, 3
      %p144 = por %p142, %p143
      %p145 = scmp.ne.s32.totalorder %s134, %s135
      %p146 = scmp.eq.s32.totalorder %s20, 0
      %p147 = por %p145, %p146
      %p148 = scmp.ne.s32.totalorder %s134, %s135
      %p149 = scmp.eq.s32.totalorder %s21, 3
      %p150 = por %p148, %p149
      %p152 = scmp.ne.s32.totalorder %s135, %s151
      %p153 = scmp.eq.s32.totalorder %s21, 0
      %p154 = por %p152, %p153
      %s155 = ssub.s32 %s23, %s30
      %p156 = scmp.eq.s32.totalorder %s155, 0
      %s158 = sadd.s32 %s157, 1
      %s159 = scalar_select %p156, %s157, %s158
      %p162 = pneg %p156
      %p163 = scmp.eq.s32.totalorder %s15, 3
      %p164 = por %p162, %p163
      %p165 = scmp.ne.s32.totalorder %s157, %s160
      %p166 = scmp.eq.s32.totalorder %s15, 0
      %p167 = por %p165, %p166
      %p168 = scmp.ne.s32.totalorder %s157, %s160
      %p169 = scmp.eq.s32.totalorder %s20, 3
      %p170 = por %p168, %p169
      %p171 = scmp.ne.s32.totalorder %s160, %s161
      %p172 = scmp.eq.s32.totalorder %s20, 0
      %p173 = por %p171, %p172
      %p174 = scmp.ne.s32.totalorder %s160, %s161
      %p175 = scmp.eq.s32.totalorder %s21, 3
      %p176 = por %p174, %p175
      %p178 = scmp.ne.s32.totalorder %s161, %s177
      %p179 = scmp.eq.s32.totalorder %s21, 0
      %p180 = por %p178, %p179
      %s181 = ssub.s32 %s22, %s34
      %s182 = ssub.s32 %s23, %s30
      %s183 = sor.u32 %s181, %s182
      %p184 = scmp.eq.s32.totalorder %s183, 0
      %s186 = sadd.s32 %s185, 1
      %s187 = scalar_select %p184, %s185, %s186
      %p190 = pneg %p184
      %p191 = scmp.eq.s32.totalorder %s15, 3
      %p192 = por %p190, %p191
      %p193 = scmp.ne.s32.totalorder %s185, %s188
      %p194 = scmp.eq.s32.totalorder %s15, 0
      %p195 = por %p193, %p194
      %p196 = scmp.ne.s32.totalorder %s185, %s188
      %p197 = scmp.eq.s32.totalorder %s20, 3
      %p198 = por %p196, %p197
      %p199 = scmp.ne.s32.totalorder %s188, %s189
      %p200 = scmp.eq.s32.totalorder %s20, 0
      %p201 = por %p199, %p200
      %p202 = scmp.ne.s32.totalorder %s188, %s189
      %p203 = scmp.eq.s32.totalorder %s21, 3
      %p204 = por %p202, %p203
      %p206 = scmp.ne.s32.totalorder %s189, %s205
      %p207 = scmp.eq.s32.totalorder %s21, 0
      %p208 = por %p206, %p207
      %p209 = scmp.le.s32.totalorder 1, %s15
      %p210 = scmp.lt.s32.totalorder %s15, 5
      %p211 = pnand %p209, %p210
      %p212 = pneg %p211
      // Predicated region
      $region9: #{tpu_custom_call.1} parent=5 // pred_check
        _
      $region10: #{tpu_custom_call.1} parent=5 // pred_check_branch
        %214 = sbr.rel (%p211) target = $region12
      $region11: #{tpu_custom_call.1} parent=5 // pred_region
        %s215 = ssub.s32 %s15, 1
        // Predicated region
        $region13: #{tpu_custom_call.1} parent=11 // pred_check
          %p216 = pneg %p100
        $region14: #{tpu_custom_call.1} parent=11 // pred_check_branch
          %218 = sbr.rel (%p216) target = $region16
        $region15: #{tpu_custom_call.1} parent=11 // pred_region
          _
        $region16: #{tpu_custom_call.1} parent=11 // pred_fallthru
          _
        // Predicated region
        $region17: #{tpu_custom_call.1} parent=11 // pred_check
          %p219 = pneg %p121
        $region18: #{tpu_custom_call.1} parent=11 // pred_check_branch
          %221 = sbr.rel (%p219) target = $region20
        $region19: #{tpu_custom_call.1} parent=11 // pred_region
          _
        $region20: #{tpu_custom_call.1} parent=11 // pred_fallthru
          _
      $region12: #{tpu_custom_call.1} parent=5 // pred_fallthru
        _
      %p222 = scmp.lt.s32.totalorder %s15, 4
      // Predicated region
      $region21: #{tpu_custom_call.1} parent=5 // pred_check
        %p223 = pneg %p222
      $region22: #{tpu_custom_call.1} parent=5 // pred_check_branch
        %225 = sbr.rel (%p223) target = $region24
      $region23: #{tpu_custom_call.1} parent=5 // pred_region
        // Predicated region
        $region25: #{tpu_custom_call.1} parent=23 // pred_check
          %p226 = pneg %p47
        $region26: #{tpu_custom_call.1} parent=23 // pred_check_branch
          %228 = sbr.rel (%p226) target = $region28
        $region27: #{tpu_custom_call.1} parent=23 // pred_region
          %s229 = smul.u32 16, %s22
          %p230 = scmp.lt.s32.totalorder %s229, 31
          %s231 = scalar_select %p230, %s229, 31
          %s232 = smul.addr %s231, 8
          %s233 = scalar_lea.vmem %s0, %s232
          %s234 = smul.u32 16, %s22
        $region28: #{tpu_custom_call.1} parent=23 // pred_fallthru
          _
        // Predicated region
        $region29: #{tpu_custom_call.1} parent=23 // pred_check
          %p235 = pneg %p73
        $region30: #{tpu_custom_call.1} parent=23 // pred_check_branch
          %237 = sbr.rel (%p235) target = $region32
        $region31: #{tpu_custom_call.1} parent=23 // pred_region
          %s238 = smul.u32 16, %s22
          %p239 = scmp.lt.s32.totalorder %s238, 31
          %s240 = scalar_select %p239, %s238, 31
          %s241 = smul.addr %s240, 8
          %s242 = scalar_lea.vmem %s1, %s241
          %s243 = smul.u32 16, %s22
        $region32: #{tpu_custom_call.1} parent=23 // pred_fallthru
          _
        // Predicated region
        $region33: #{tpu_custom_call.1} parent=23 // pred_check
          %p244 = pneg %p141
        $region34: #{tpu_custom_call.1} parent=23 // pred_check_branch
          %246 = sbr.rel (%p244) target = $region36
        $region35: #{tpu_custom_call.1} parent=23 // pred_region
          %s247 = sand.u32 %s131, 1
          %s248 = sand.u32 %s131, 1
          %s249 = smul.addr %s248, 32
          %s250 = scalar_lea.vmem [#allocation3], %s249
          %s251 = smul.addr %s23, 8
          %s252 = scalar_lea.vmem %s4, %s251
          // Predicated region
          $region37: #{tpu_custom_call.1} parent=35 // pred_check
            _
          $region38: #{tpu_custom_call.1} parent=35 // pred_check_branch
            %254 = sbr.rel (0) target = $region40
          $region39: #{tpu_custom_call.1} parent=35 // pred_region
            // Predicated region
            $region41: #{tpu_custom_call.1} parent=39 // pred_check
              _
            $region42: #{tpu_custom_call.1} parent=39 // pred_check_branch
              %256 = sbr.rel (0) target = $region44
            $region43: #{tpu_custom_call.1} parent=39 // pred_region
              // Predicated region
              $region56: #{tpu_custom_call.1} parent=43 // pred_check
                _
              $region57: #{tpu_custom_call.1} parent=43 // pred_check_branch
                %278 = sbr.rel (0) target = $region59
              $region58: #{tpu_custom_call.1} parent=43 // pred_region
                loop: start=0, step=1, limit=1
                $region60: #{tpu_custom_call.1} parent=58 // loop_pre_header
                  _
                $region61: #{tpu_custom_call.1} parent=58 // loop_header
                  %s280 = sphi 0, %s284
                  %p281 = scmp.ge.s32.totalorder %s280, 1
                  %s285 = sphi %s252, %s252
                  %s286 = sphi %s250, %s250
                $region62: #{tpu_custom_call.1} parent=58 // loop_header_branch
                  %283 = sbr.rel (%p281) target = $region66
                $region63: #{tpu_custom_call.1} parent=58 // loop_body
                  %v287 = vld [vmem:[%s285] sm:$0xff]
                  %288 = vst [vmem:[%s286] sm:$0xff] %v287
                  %v289 = vld [vmem:[%s285 + $0x10] sm:$0xff]
                  %290 = vst [vmem:[%s286 + $0x8] sm:$0xff] %v289
                  %v291 = vld [vmem:[%s285 + $0x20] sm:$0xff]
                  %292 = vst [vmem:[%s286 + $0x10] sm:$0xff] %v291
                  %v293 = vld [vmem:[%s285 + $0x30] sm:$0xff]
                  %294 = vst [vmem:[%s286 + $0x18] sm:$0xff] %v293
                $region64: #{tpu_custom_call.1} parent=58 // loop_footer
                  %s284 = sadd.s32 1, %s280
                $region65: #{tpu_custom_call.1} parent=58 // loop_footer_branch
                  %279 = sbr.rel target = $region61
                $region66: #{tpu_custom_call.1} parent=58 // loop_exit
                  _
              $region59: #{tpu_custom_call.1} parent=43 // pred_fallthru
                _
              // Predicated region
              $region67: #{tpu_custom_call.1} parent=43 // pred_check
                _
              $region68: #{tpu_custom_call.1} parent=43 // pred_check_branch
                %296 = sbr.rel target = $region70
              $region69: #{tpu_custom_call.1} parent=43 // pred_region
                _
              $region70: #{tpu_custom_call.1} parent=43 // pred_fallthru
                _
            $region44: #{tpu_custom_call.1} parent=39 // pred_fallthru
              _
            // Predicated region
            $region45: #{tpu_custom_call.1} parent=39 // pred_check
              _
            $region46: #{tpu_custom_call.1} parent=39 // pred_check_branch
              %258 = sbr.rel target = $region48
            $region47: #{tpu_custom_call.1} parent=39 // pred_region
              %s260 = ssub.s32 256, 1
              loop: start=0, step=1, limit=1
              $region49: #{tpu_custom_call.1} parent=47 // loop_pre_header
                _
              $region50: #{tpu_custom_call.1} parent=47 // loop_header
                %s262 = sphi 0, %s266
                %p263 = scmp.ge.s32.totalorder %s262, 1
                %s267 = sphi %s252, %s252
                %s268 = sphi %s250, %s250
              $region51: #{tpu_custom_call.1} parent=47 // loop_header_branch
                %265 = sbr.rel (%p263) target = $region55
              $region52: #{tpu_custom_call.1} parent=47 // loop_body
                %v269 = vld [vmem:[%s267] sm:%s260]
                %270 = vst [vmem:[%s268] sm:%s260] %v269
                %v271 = vld [vmem:[%s267 + $0x10] sm:%s260]
                %272 = vst [vmem:[%s268 + $0x8] sm:%s260] %v271
                %v273 = vld [vmem:[%s267 + $0x20] sm:%s260]
                %274 = vst [vmem:[%s268 + $0x10] sm:%s260] %v273
                %v275 = vld [vmem:[%s267 + $0x30] sm:%s260]
                %276 = vst [vmem:[%s268 + $0x18] sm:%s260] %v275
              $region53: #{tpu_custom_call.1} parent=47 // loop_footer
                %s266 = sadd.s32 1, %s262
              $region54: #{tpu_custom_call.1} parent=47 // loop_footer_branch
                %261 = sbr.rel target = $region50
              $region55: #{tpu_custom_call.1} parent=47 // loop_exit
                _
            $region48: #{tpu_custom_call.1} parent=39 // pred_fallthru
              _
          $region40: #{tpu_custom_call.1} parent=35 // pred_fallthru
            _
          %297 = vnop
        $region36: #{tpu_custom_call.1} parent=23 // pred_fallthru
          _
        // Predicated region
        $region71: #{tpu_custom_call.1} parent=23 // pred_check
          %p298 = pneg %p167
        $region72: #{tpu_custom_call.1} parent=23 // pred_check_branch
          %300 = sbr.rel (%p298) target = $region74
        $region73: #{tpu_custom_call.1} parent=23 // pred_region
          %p301 = scmp.lt.s32.totalorder %s23, 1
          %s302 = scalar_select %p301, %s23, 1
          %s303 = scalar_lea.vmem %s5, %s302
        $region74: #{tpu_custom_call.1} parent=23 // pred_fallthru
          _
      $region24: #{tpu_custom_call.1} parent=5 // pred_fallthru
        _
      %p304 = scmp.le.s32.totalorder 1, %s15
      %p305 = scmp.lt.s32.totalorder %s15, 5
      %p306 = pnand %p304, %p305
      %p307 = pneg %p306
      // Predicated region
      $region75: #{tpu_custom_call.1} parent=5 // pred_check
        _
      $region76: #{tpu_custom_call.1} parent=5 // pred_check_branch
        %309 = sbr.rel (%p306) target = $region78
      $region77: #{tpu_custom_call.1} parent=5 // pred_region
        %s310 = ssub.s32 %s15, 1
        %s311 = sand.u32 %s134, 1
        %s312 = sand.u32 %s134, 1
        %s313 = smul.addr %s312, 32
        %s314 = scalar_lea.vmem [#allocation3], %s313
        // Predicated region
        $region79: #{tpu_custom_call.1} parent=77 // pred_check
          %p315 = pneg %p147
        $region80: #{tpu_custom_call.1} parent=77 // pred_check_branch
          %317 = sbr.rel (%p315) target = $region82
        $region81: #{tpu_custom_call.1} parent=77 // pred_region
          _
        $region82: #{tpu_custom_call.1} parent=77 // pred_fallthru
          _
        %s318 = smul.u32 16, %s24
        %p319 = scmp.lt.s32.totalorder %s318, 31
        %s320 = scalar_select %p319, %s318, 31
        %s321 = smul.addr %s320, 8
        %s322 = scalar_lea.vmem %s0, %s321
        %p323 = pneg %p53
        %p324 = pneg %p50
        %s325 = smul.u32 16, %s24
        %p326 = scmp.lt.s32.totalorder %s325, 31
        %s327 = scalar_select %p326, %s325, 31
        %s328 = smul.addr %s327, 8
        %s329 = scalar_lea.vmem %s1, %s328
        %p330 = pneg %p79
        %p331 = pneg %p76
        %p332 = pneg %p100
        %p333 = pneg %p97
        %p334 = pneg %p121
        %p335 = pneg %p118
        %s336 = sand.u32 %s134, 1
        %s337 = sand.u32 %s134, 1
        %s338 = smul.addr %s337, 32
        %s339 = scalar_lea.vmem [#allocation3], %s338
        %p340 = pneg %p147
        %p341 = pneg %p144
        %p342 = scmp.lt.s32.totalorder %s25, 1
        %s343 = scalar_select %p342, %s25, 1
        %s344 = scalar_lea.vmem %s5, %s343
        %p345 = pneg %p173
        %p346 = pneg %p170
        %p347 = pneg %p201
        %p348 = pneg %p198
        %s349 = sand.u32 %s188, 1
        %s350 = scalar_lea.sflag [#allocation5], %s349
        %s351 = sand.u32 %s188, 1
        %s352 = smul.addr %s351, 128
        %s353 = scalar_lea.vmem [#allocation4], %s352
        %s354 = smul.u32 16, %s24
        %p355 = scmp.lt.s32.totalorder %s354, 31
        %s356 = scalar_select %p355, %s354, 31
        %s357 = smul.addr %s356, 8
        %s358 = scalar_lea.vmem %s0, %s357
        %s359 = smul.u32 16, %s24
        %s360 = smul.u32 16, %s24
        %p361 = scmp.lt.s32.totalorder %s360, 31
        %s362 = scalar_select %p361, %s360, 31
        %s363 = smul.addr %s362, 8
        %s364 = scalar_lea.vmem %s1, %s363
        %s365 = smul.u32 16, %s24
        %p366 = scmp.lt.s32.totalorder %s25, 1
        %s367 = scalar_select %p366, %s25, 1
        %s368 = scalar_lea.vmem %s5, %s367
        %s369 = smul.u32 16, %s24
        %p370 = scmp.eq.s32.totalorder %s25, 0
        // Predicated region
        $region83: #{tpu_custom_call.1} parent=77 // pred_check
          %p371 = pneg %p370
        $region84: #{tpu_custom_call.1} parent=77 // pred_check_branch
          %373 = sbr.rel (%p371) target = $region86
        $region85: #{tpu_custom_call.1} parent=77 // pred_region
          %v374 = vld [vmem:[%s358] sm:$0xff]
          %v375 = vld [vmem:[%s358 + $0x8] sm:$0xff]
          %v376 = vld [vmem:[%s358 + $0x10] sm:$0xff]
          %v377 = vld [vmem:[%s358 + $0x18] sm:$0xff]
          %v378 = vld [vmem:[%s358 + $0x20] sm:$0xff]
          %v379 = vld [vmem:[%s358 + $0x28] sm:$0xff]
          %v380 = vld [vmem:[%s358 + $0x30] sm:$0xff]
          %v381 = vld [vmem:[%s358 + $0x38] sm:$0xff]
          %v382 = vld [vmem:[%s358 + $0x40] sm:$0xff]
          %v383 = vld [vmem:[%s358 + $0x48] sm:$0xff]
          %v384 = vld [vmem:[%s358 + $0x50] sm:$0xff]
          %v385 = vld [vmem:[%s358 + $0x58] sm:$0xff]
          %v386 = vld [vmem:[%s358 + $0x60] sm:$0xff]
          %v387 = vld [vmem:[%s358 + $0x68] sm:$0xff]
          %v388 = vld [vmem:[%s358 + $0x70] sm:$0xff]
          %v389 = vld [vmem:[%s358 + $0x78] sm:$0xff]
          %v390 = vld [vmem:[%s364] sm:$0xff]
          %v391 = vld [vmem:[%s364 + $0x8] sm:$0xff]
          %v392 = vld [vmem:[%s364 + $0x10] sm:$0xff]
          %v393 = vld [vmem:[%s364 + $0x18] sm:$0xff]
          %v394 = vld [vmem:[%s364 + $0x20] sm:$0xff]
          %v395 = vld [vmem:[%s364 + $0x28] sm:$0xff]
          %v396 = vld [vmem:[%s364 + $0x30] sm:$0xff]
          %v397 = vld [vmem:[%s364 + $0x38] sm:$0xff]
          %v398 = vld [vmem:[%s364 + $0x40] sm:$0xff]
          %v399 = vld [vmem:[%s364 + $0x48] sm:$0xff]
          %v400 = vld [vmem:[%s364 + $0x50] sm:$0xff]
          %v401 = vld [vmem:[%s364 + $0x58] sm:$0xff]
          %v402 = vld [vmem:[%s364 + $0x60] sm:$0xff]
          %v403 = vld [vmem:[%s364 + $0x68] sm:$0xff]
          %v404 = vld [vmem:[%s364 + $0x70] sm:$0xff]
          %v405 = vld [vmem:[%s364 + $0x78] sm:$0xff]
          %v406 = vmul.f32 %v374, %v390
          %v407 = vmul.f32 %v375, %v391
          %v408 = vmul.f32 %v376, %v392
          %v409 = vmul.f32 %v377, %v393
          %v410 = vmul.f32 %v378, %v394
          %v411 = vmul.f32 %v379, %v395
          %v412 = vmul.f32 %v380, %v396
          %v413 = vmul.f32 %v381, %v397
          %v414 = vmul.f32 %v382, %v398
          %v415 = vmul.f32 %v383, %v399
          %v416 = vmul.f32 %v384, %v400
          %v417 = vmul.f32 %v385, %v401
          %v418 = vmul.f32 %v386, %v402
          %v419 = vmul.f32 %v387, %v403
          %v420 = vmul.f32 %v388, %v404
          %v421 = vmul.f32 %v389, %v405
          %v422 = vld [vmem:[%s2] sm:$0xff]
          %v423 = vld [vmem:[%s2 + $0x8] sm:$0xff]
          %v424 = vld [vmem:[%s3] sm:$0x1]
          %v426 = vperm.slane %v424, 0
          %vm428 = vcmask 130048
          %v430 = vsel %vm428, %v406, 0
          %v433 = vsel %vm428, %v407, 0
          %v436 = vsel %vm428, %v408, 0
          %v439 = vsel %vm428, %v409, 0
          %v442 = vsel %vm428, %v410, 0
          %v445 = vsel %vm428, %v411, 0
          %v448 = vsel %vm428, %v412, 0
          %v451 = vsel %vm428, %v413, 0
          %v454 = vsel %vm428, %v414, 0
          %v457 = vsel %vm428, %v415, 0
          %v460 = vsel %vm428, %v416, 0
          %v463 = vsel %vm428, %v417, 0
          %v466 = vsel %vm428, %v418, 0
          %v469 = vsel %vm428, %v419, 0
          %v472 = vsel %vm428, %v420, 0
          %v475 = vsel %vm428, %v421, 0
          %477 = vmatpush.msra.mxu0 0.0
          %478 = vmatpush.msra.mxu0 0.0
          %479 = vmatpush.msra.mxu0 0.0
          %480 = vmatpush.msra.mxu0 0.0
          %481 = vmatpush.msra.mxu0 0.0
          %482 = vmatpush.msra.mxu0 0.0
          %483 = vmatpush.msra.mxu0 0.0
          %484 = vmatpush.msra.mxu0 0.0
          %485 = vmatpush.msra.mxu0 0.0
          %486 = vmatpush.msra.mxu0 0.0
          %487 = vmatpush.msra.mxu0 0.0
          %488 = vmatpush.msra.mxu0 0.0
          %489 = vmatpush.msra.mxu0 0.0
          %490 = vmatpush.msra.mxu0 0.0
          %491 = vmatpush.msra.mxu0 %v423
          %492 = vmatpush.msra.mxu0 %v422
          %493 = vmatmul.f32.gmra.mxu0 %v430
          %v494 = vpop.f32.mrf.mxu0
          %v495 = vadd.f32 %v426, %v494
          %496 = vmatmul.f32.gmra.mxu0 %v433
          %v497 = vpop.f32.mrf.mxu0
          %v498 = vadd.f32 %v426, %v497
          %499 = vmatmul.f32.gmra.mxu0 %v436
          %v500 = vpop.f32.mrf.mxu0
          %v501 = vadd.f32 %v426, %v500
          %502 = vmatmul.f32.gmra.mxu0 %v439
          %v503 = vpop.f32.mrf.mxu0
          %v504 = vadd.f32 %v426, %v503
          %505 = vmatmul.f32.gmra.mxu0 %v442
          %v506 = vpop.f32.mrf.mxu0
          %v507 = vadd.f32 %v426, %v506
          %508 = vmatmul.f32.gmra.mxu0 %v445
          %v509 = vpop.f32.mrf.mxu0
          %v510 = vadd.f32 %v426, %v509
          %511 = vmatmul.f32.gmra.mxu0 %v448
          %v512 = vpop.f32.mrf.mxu0
          %v513 = vadd.f32 %v426, %v512
          %514 = vmatmul.f32.gmra.mxu0 %v451
          %v515 = vpop.f32.mrf.mxu0
          %v516 = vadd.f32 %v426, %v515
          %517 = vmatmul.f32.gmra.mxu0 %v454
          %v518 = vpop.f32.mrf.mxu0
          %v519 = vadd.f32 %v426, %v518
          %520 = vmatmul.f32.gmra.mxu0 %v457
          %v521 = vpop.f32.mrf.mxu0
          %v522 = vadd.f32 %v426, %v521
          %523 = vmatmul.f32.gmra.mxu0 %v460
          %v524 = vpop.f32.mrf.mxu0
          %v525 = vadd.f32 %v426, %v524
          %526 = vmatmul.f32.gmra.mxu0 %v463
          %v527 = vpop.f32.mrf.mxu0
          %v528 = vadd.f32 %v426, %v527
          %529 = vmatmul.f32.gmra.mxu0 %v466
          %v530 = vpop.f32.mrf.mxu0
          %v531 = vadd.f32 %v426, %v530
          %532 = vmatmul.f32.gmra.mxu0 %v469
          %v533 = vpop.f32.mrf.mxu0
          %v534 = vadd.f32 %v426, %v533
          %535 = vmatmul.f32.gmra.mxu0 %v472
          %v536 = vpop.f32.mrf.mxu0
          %v537 = vadd.f32 %v426, %v536
          %538 = vmatmul.f32.gmra.mxu0 %v475
          %v539 = vpop.f32.mrf.mxu0
          %v540 = vadd.f32 %v426, %v539
          %541 = vdwg.mxu0
          %v542 = vmax.f32 %v495, 0.0
          %v543 = vmax.f32 %v498, 0.0
          %v544 = vmax.f32 %v501, 0.0
          %v545 = vmax.f32 %v504, 0.0
          %v546 = vmax.f32 %v507, 0.0
          %v547 = vmax.f32 %v510, 0.0
          %v548 = vmax.f32 %v513, 0.0
          %v549 = vmax.f32 %v516, 0.0
          %v550 = vmax.f32 %v519, 0.0
          %v551 = vmax.f32 %v522, 0.0
          %v552 = vmax.f32 %v525, 0.0
          %v553 = vmax.f32 %v528, 0.0
          %v554 = vmax.f32 %v531, 0.0
          %v555 = vmax.f32 %v534, 0.0
          %v556 = vmax.f32 %v537, 0.0
          %v557 = vmax.f32 %v540, 0.0
          %vm558 = vcmask 261120
          %559 = vst.msk [vmem:[#allocation2] sm:$0xff] %vm558, %v542
          %560 = vst.msk [vmem:[#allocation2 + $0x8] sm:$0xff] %vm558, %v543
          %561 = vst.msk [vmem:[#allocation2 + $0x10] sm:$0xff] %vm558, %v544
          %562 = vst.msk [vmem:[#allocation2 + $0x18] sm:$0xff] %vm558, %v545
          %563 = vst.msk [vmem:[#allocation2 + $0x20] sm:$0xff] %vm558, %v546
          %564 = vst.msk [vmem:[#allocation2 + $0x28] sm:$0xff] %vm558, %v547
          %565 = vst.msk [vmem:[#allocation2 + $0x30] sm:$0xff] %vm558, %v548
          %566 = vst.msk [vmem:[#allocation2 + $0x38] sm:$0xff] %vm558, %v549
          %567 = vst.msk [vmem:[#allocation2 + $0x40] sm:$0xff] %vm558, %v550
          %568 = vst.msk [vmem:[#allocation2 + $0x48] sm:$0xff] %vm558, %v551
          %569 = vst.msk [vmem:[#allocation2 + $0x50] sm:$0xff] %vm558, %v552
          %570 = vst.msk [vmem:[#allocation2 + $0x58] sm:$0xff] %vm558, %v553
          %571 = vst.msk [vmem:[#allocation2 + $0x60] sm:$0xff] %vm558, %v554
          %572 = vst.msk [vmem:[#allocation2 + $0x68] sm:$0xff] %vm558, %v555
          %573 = vst.msk [vmem:[#allocation2 + $0x70] sm:$0xff] %vm558, %v556
          %574 = vst.msk [vmem:[#allocation2 + $0x78] sm:$0xff] %vm558, %v557
        $region86: #{tpu_custom_call.1} parent=77 // pred_fallthru
          _
        %v575 = vld [vmem:[#allocation2] sm:$0xff]
        %v576 = vld [vmem:[#allocation2 + $0x8] sm:$0xff]
        %v577 = vld [vmem:[#allocation2 + $0x10] sm:$0xff]
        %v578 = vld [vmem:[#allocation2 + $0x18] sm:$0xff]
        %v579 = vld [vmem:[#allocation2 + $0x20] sm:$0xff]
        %v580 = vld [vmem:[#allocation2 + $0x28] sm:$0xff]
        %v581 = vld [vmem:[#allocation2 + $0x30] sm:$0xff]
        %v582 = vld [vmem:[#allocation2 + $0x38] sm:$0xff]
        %v583 = vld [vmem:[#allocation2 + $0x40] sm:$0xff]
        %v584 = vld [vmem:[#allocation2 + $0x48] sm:$0xff]
        %v585 = vld [vmem:[#allocation2 + $0x50] sm:$0xff]
        %v586 = vld [vmem:[#allocation2 + $0x58] sm:$0xff]
        %v587 = vld [vmem:[#allocation2 + $0x60] sm:$0xff]
        %v588 = vld [vmem:[#allocation2 + $0x68] sm:$0xff]
        %v589 = vld [vmem:[#allocation2 + $0x70] sm:$0xff]
        %v590 = vld [vmem:[#allocation2 + $0x78] sm:$0xff]
        %v591 = vld [vmem:[%s314] sm:$0xff]
        %v592 = vld [vmem:[%s314 + $0x8] sm:$0xff]
        %v593 = vld [vmem:[%s314 + $0x10] sm:$0xff]
        %v594 = vld [vmem:[%s314 + $0x18] sm:$0xff]
        %v595 = vld [vmem:[%s368] sm:$0x1]
        %v597 = vperm.slane %v595, 0
        %vm599 = vcmask 261120
        %v601 = vsel %vm599, %v575, 0
        %v604 = vsel %vm599, %v576, 0
        %v607 = vsel %vm599, %v577, 0
        %v610 = vsel %vm599, %v578, 0
        %v613 = vsel %vm599, %v579, 0
        %v616 = vsel %vm599, %v580, 0
        %v619 = vsel %vm599, %v581, 0
        %v622 = vsel %vm599, %v582, 0
        %v625 = vsel %vm599, %v583, 0
        %v628 = vsel %vm599, %v584, 0
        %v631 = vsel %vm599, %v585, 0
        %v634 = vsel %vm599, %v586, 0
        %v637 = vsel %vm599, %v587, 0
        %v640 = vsel %vm599, %v588, 0
        %v643 = vsel %vm599, %v589, 0
        %v646 = vsel %vm599, %v590, 0
        %648 = vmatpush.msra.mxu0 0.0
        %649 = vmatpush.msra.mxu0 0.0
        %650 = vmatpush.msra.mxu0 0.0
        %651 = vmatpush.msra.mxu0 0.0
        %652 = vmatpush.msra.mxu0 0.0
        %653 = vmatpush.msra.mxu0 0.0
        %654 = vmatpush.msra.mxu0 0.0
        %655 = vmatpush.msra.mxu0 0.0
        %656 = vmatpush.msra.mxu0 0.0
        %657 = vmatpush.msra.mxu0 0.0
        %658 = vmatpush.msra.mxu0 0.0
        %659 = vmatpush.msra.mxu0 0.0
        %660 = vmatpush.msra.mxu0 %v594
        %661 = vmatpush.msra.mxu0 %v593
        %662 = vmatpush.msra.mxu0 %v592
        %663 = vmatpush.msra.mxu0 %v591
        %664 = vmatmul.f32.gmra.mxu0 %v601
        %v665 = vpop.f32.mrf.mxu0
        %v666 = vadd.f32 %v597, %v665
        %667 = vmatmul.f32.gmra.mxu0 %v604
        %v668 = vpop.f32.mrf.mxu0
        %v669 = vadd.f32 %v597, %v668
        %670 = vmatmul.f32.gmra.mxu0 %v607
        %v671 = vpop.f32.mrf.mxu0
        %v672 = vadd.f32 %v597, %v671
        %673 = vmatmul.f32.gmra.mxu0 %v610
        %v674 = vpop.f32.mrf.mxu0
        %v675 = vadd.f32 %v597, %v674
        %676 = vmatmul.f32.gmra.mxu0 %v613
        %v677 = vpop.f32.mrf.mxu0
        %v678 = vadd.f32 %v597, %v677
        %679 = vmatmul.f32.gmra.mxu0 %v616
        %v680 = vpop.f32.mrf.mxu0
        %v681 = vadd.f32 %v597, %v680
        %682 = vmatmul.f32.gmra.mxu0 %v619
        %v683 = vpop.f32.mrf.mxu0
        %v684 = vadd.f32 %v597, %v683
        %685 = vmatmul.f32.gmra.mxu0 %v622
        %v686 = vpop.f32.mrf.mxu0
        %v687 = vadd.f32 %v597, %v686
        %688 = vmatmul.f32.gmra.mxu0 %v625
        %v689 = vpop.f32.mrf.mxu0
        %v690 = vadd.f32 %v597, %v689
        %691 = vmatmul.f32.gmra.mxu0 %v628
        %v692 = vpop.f32.mrf.mxu0
        %v693 = vadd.f32 %v597, %v692
        %694 = vmatmul.f32.gmra.mxu0 %v631
        %v695 = vpop.f32.mrf.mxu0
        %v696 = vadd.f32 %v597, %v695
        %697 = vmatmul.f32.gmra.mxu0 %v634
        %v698 = vpop.f32.mrf.mxu0
        %v699 = vadd.f32 %v597, %v698
        %700 = vmatmul.f32.gmra.mxu0 %v637
        %v701 = vpop.f32.mrf.mxu0
        %v702 = vadd.f32 %v597, %v701
        %703 = vmatmul.f32.gmra.mxu0 %v640
        %v704 = vpop.f32.mrf.mxu0
        %v705 = vadd.f32 %v597, %v704
        %706 = vmatmul.f32.gmra.mxu0 %v643
        %v707 = vpop.f32.mrf.mxu0
        %v708 = vadd.f32 %v597, %v707
        %709 = vmatmul.f32.gmra.mxu0 %v646
        %v710 = vpop.f32.mrf.mxu0
        %v711 = vadd.f32 %v597, %v710
        %712 = vdwg.mxu0
        %v713 = vmul.f32 %v666, 0.5
        %v714 = vmul.f32 %v669, 0.5
        %v715 = vmul.f32 %v672, 0.5
        %v716 = vmul.f32 %v675, 0.5
        %v717 = vmul.f32 %v678, 0.5
        %v718 = vmul.f32 %v681, 0.5
        %v719 = vmul.f32 %v684, 0.5
        %v720 = vmul.f32 %v687, 0.5
        %v721 = vmul.f32 %v690, 0.5
        %v722 = vmul.f32 %v693, 0.5
        %v723 = vmul.f32 %v696, 0.5
        %v724 = vmul.f32 %v699, 0.5
        %v725 = vmul.f32 %v702, 0.5
        %v726 = vmul.f32 %v705, 0.5
        %v727 = vmul.f32 %v708, 0.5
        %v728 = vmul.f32 %v711, 0.5
        %v729 = vtanh.pop %v713
        %v730 = vtanh.pop %v714
        %v731 = vtanh.pop %v715
        %v732 = vtanh.pop %v716
        %v733 = vtanh.pop %v717
        %v734 = vtanh.pop %v718
        %v735 = vtanh.pop %v719
        %v736 = vtanh.pop %v720
        %v737 = vtanh.pop %v721
        %v738 = vtanh.pop %v722
        %v739 = vtanh.pop %v723
        %v740 = vtanh.pop %v724
        %v741 = vtanh.pop %v725
        %v742 = vtanh.pop %v726
        %v743 = vtanh.pop %v727
        %v744 = vtanh.pop %v728
        %v745 = vadd.f32 %v729, 1.0
        %v746 = vadd.f32 %v730, 1.0
        %v747 = vadd.f32 %v731, 1.0
        %v748 = vadd.f32 %v732, 1.0
        %v749 = vadd.f32 %v733, 1.0
        %v750 = vadd.f32 %v734, 1.0
        %v751 = vadd.f32 %v735, 1.0
        %v752 = vadd.f32 %v736, 1.0
        %v753 = vadd.f32 %v737, 1.0
        %v754 = vadd.f32 %v738, 1.0
        %v755 = vadd.f32 %v739, 1.0
        %v756 = vadd.f32 %v740, 1.0
        %v757 = vadd.f32 %v741, 1.0
        %v758 = vadd.f32 %v742, 1.0
        %v759 = vadd.f32 %v743, 1.0
        %v760 = vadd.f32 %v744, 1.0
        %v761 = vmul.f32 %v745, 0.5
        %v762 = vmul.f32 %v746, 0.5
        %v763 = vmul.f32 %v747, 0.5
        %v764 = vmul.f32 %v748, 0.5
        %v765 = vmul.f32 %v749, 0.5
        %v766 = vmul.f32 %v750, 0.5
        %v767 = vmul.f32 %v751, 0.5
        %v768 = vmul.f32 %v752, 0.5
        %v769 = vmul.f32 %v753, 0.5
        %v770 = vmul.f32 %v754, 0.5
        %v771 = vmul.f32 %v755, 0.5
        %v772 = vmul.f32 %v756, 0.5
        %v773 = vmul.f32 %v757, 0.5
        %v774 = vmul.f32 %v758, 0.5
        %v775 = vmul.f32 %v759, 0.5
        %v776 = vmul.f32 %v760, 0.5
        %777 = vst [vmem:[%s353] sm:$0xff] %v761
        %778 = vst [vmem:[%s353 + $0x8] sm:$0xff] %v762
        %779 = vst [vmem:[%s353 + $0x10] sm:$0xff] %v763
        %780 = vst [vmem:[%s353 + $0x18] sm:$0xff] %v764
        %781 = vst [vmem:[%s353 + $0x20] sm:$0xff] %v765
        %782 = vst [vmem:[%s353 + $0x28] sm:$0xff] %v766
        %783 = vst [vmem:[%s353 + $0x30] sm:$0xff] %v767
        %784 = vst [vmem:[%s353 + $0x38] sm:$0xff] %v768
        %785 = vst [vmem:[%s353 + $0x40] sm:$0xff] %v769
        %786 = vst [vmem:[%s353 + $0x48] sm:$0xff] %v770
        %787 = vst [vmem:[%s353 + $0x50] sm:$0xff] %v771
        %788 = vst [vmem:[%s353 + $0x58] sm:$0xff] %v772
        %789 = vst [vmem:[%s353 + $0x60] sm:$0xff] %v773
        %790 = vst [vmem:[%s353 + $0x68] sm:$0xff] %v774
        %791 = vst [vmem:[%s353 + $0x70] sm:$0xff] %v775
        %792 = vst [vmem:[%s353 + $0x78] sm:$0xff] %v776
        %s793 = sand.u32 %s188, 1
        %s794 = scalar_lea.sflag [#allocation5], %s793
        %s795 = sand.u32 %s188, 1
        %s796 = smul.addr %s795, 128
        %s797 = scalar_lea.vmem [#allocation4], %s796
        // Predicated region
        $region87: #{tpu_custom_call.1} parent=77 // pred_check
          %p798 = pneg %p198
        $region88: #{tpu_custom_call.1} parent=77 // pred_check_branch
          %800 = sbr.rel (%p798) target = $region90
        $region89: #{tpu_custom_call.1} parent=77 // pred_region
          %s801 = smul.u32 16, %s24
          %803 = vsyncadd %s794, 0
          %s804 = smul.addr %s801, 2
          %s805 = sadd.s32 %s25, %s804
          %s806 = smul.addr %s805, 8
          %s807 = scalar_lea.hbm %s6, %s806
          %s808 = sshll.u32 %s797, 4
          %s809 = int_to_ptr.vmem [resolvable:$true] %s808
          %s810 = sshll.u32 %s807, 4
          %s811 = int_to_ptr.hbm [resolvable:$true] %s810
          %816 = dma.vmem_to_hbm [thread:$0]  %s809, 2048, %s811, %s794, 128, 256, 8
        $region90: #{tpu_custom_call.1} parent=77 // pred_fallthru
          _
      $region78: #{tpu_custom_call.1} parent=5 // pred_fallthru
        _
      %p817 = scmp.le.s32.totalorder 2, %s15
      // Predicated region
      $region91: #{tpu_custom_call.1} parent=5 // pred_check
        %p818 = pneg %p817
      $region92: #{tpu_custom_call.1} parent=5 // pred_check_branch
        %820 = sbr.rel (%p818) target = $region94
      $region93: #{tpu_custom_call.1} parent=5 // pred_region
        %s821 = ssub.s32 %s15, 2
        // Predicated region
        $region95: #{tpu_custom_call.1} parent=93 // pred_check
          %p822 = pneg %p204
        $region96: #{tpu_custom_call.1} parent=93 // pred_check_branch
          %824 = sbr.rel (%p822) target = $region98
        $region97: #{tpu_custom_call.1} parent=93 // pred_region
          %s825 = sand.u32 %s189, 1
          %s826 = scalar_lea.sflag [#allocation5], %s825
          %s827 = sand.u32 %s189, 1
          %s828 = smul.addr %s827, 128
          %s829 = scalar_lea.vmem [#allocation4], %s828
          %831 = dma.done %s826, 2048
        $region98: #{tpu_custom_call.1} parent=93 // pred_fallthru
          _
      $region94: #{tpu_custom_call.1} parent=5 // pred_fallthru
        _
    $region6: #{tpu_custom_call.1} parent=1 // loop_footer
      %s19 = sadd.s32 1, %s15
    $region7: #{tpu_custom_call.1} parent=1 // loop_footer_branch
      %14 = sbr.rel target = $region3
    $region8: #{tpu_custom_call.1} parent=1 // loop_exit
      _
    %832 = vsyncpa [#allocation5], 1
    %s833 = scalar_lea.sflag [#allocation5], 1
    %834 = vsyncpa %s833, 1

</llo_original>
